<compile_context>
chip_gen: v7x
topology: tpu7x:2x2x1
jax: 0.10.0
libtpu: 0.0.40
codegen_flags: <defaults>
</compile_context>

<pallas_src>
import jax
import jax.numpy as jnp
from jax.experimental import pallas as pl
from jax.experimental.pallas import tpu as pltpu


def _round_up(x: int, m: int) -> int:
    return ((x + m - 1) // m) * m


def _make_mlp_kernel(num_layers: int):
    """Fused MLP kernel: (Linear+ReLU) x (num_layers-1) -> Linear.

    refs = (x_ref, w0_ref, b0_ref, ..., w{L-1}_ref, b{L-1}_ref, o_ref).
    Weights are bf16 (MXU operand dtype); activations are cast to bf16 only at
    the dot inputs; accumulation, bias add and ReLU are f32.
    """

    def kernel(*refs):
        x_ref, o_ref = refs[0], refs[-1]
        wb_refs = refs[1:-1]
        h = x_ref[...]
        for layer in range(num_layers):
            w_ref = wb_refs[2 * layer]
            b_ref = wb_refs[2 * layer + 1]
            h = jnp.dot(h.astype(jnp.bfloat16), w_ref[...],
                        preferred_element_type=jnp.float32) + b_ref[...]
            if layer < num_layers - 1:  # no activation after the last layer
                h = jnp.maximum(h, 0.0)
        o_ref[...] = h.astype(o_ref.dtype)

    return kernel


def prepare_params(params):
    """One-time parameter prep, hoisted out of the forward path.

    params: sequence of (w, b); w is [in_features, out_features] (transposed vs
    PyTorch nn.Linear weight), b is [out_features].  Weights are cast to bf16
    (MXU operand dtype); biases stay f32 and are reshaped to [1, out_features].
    Call this once at init and reuse the result for every forward.
    """
    prepped = []
    for w, b in params:
        prepped.append((jnp.asarray(w, jnp.bfloat16),
                        jnp.asarray(b, jnp.float32).reshape(1, -1)))
    return tuple(prepped)


def mlp_forward(x, prepped_params, *, batch_tile=1024, min_grid_steps=4):
    """Run the fused MLP kernel.

    prepped_params: output of prepare_params().  x: [B, input_dim] float32.
    Output: [B, output_dim] float32 (bf16 matmul operands, f32 accumulation —
    intentional ~0.4-1% deviation from a pure-f32 torch forward).
    """
    num_layers = len(prepped_params)
    B, in_dim = x.shape
    out_dim = prepped_params[-1][0].shape[1]

    # ---- batch tiling --------------------------------------------------------
    # Target >= min_grid_steps grid steps when B allows (v7x megacore sharding +
    # DMA/compute pipelining), capped at batch_tile rows per step.  x/out are
    # f32 in HBM, so the sublane granule for the tile is 8 rows.
    tb = max(8, min(batch_tile, _round_up(pl.cdiv(B, min_grid_steps), 8)))
    B_p = _round_up(B, tb)
    grid = (B_p // tb,)

    # Only pad batch rows (no feature-dim padding anywhere).
    xp = x if B_p == B else jnp.pad(x, ((0, B_p - B), (0, 0)))

    # ---- specs ---------------------------------------------------------------
    # x / out are tiled along the batch.  Weights & biases use constant
    # index_maps (DMA'd once, resident across all batch tiles) and are
    # single-buffered — no point double-buffering blocks that never change.
    in_specs = [pl.BlockSpec((tb, in_dim), lambda i: (i, 0))]
    flat_params = []
    for w, b in prepped_params:
        in_specs.append(pl.BlockSpec(w.shape, lambda i: (0, 0),
                                     pipeline_mode=pl.Buffered(1)))
        in_specs.append(pl.BlockSpec(b.shape, lambda i: (0, 0),
                                     pipeline_mode=pl.Buffered(1)))
        flat_params += [w, b]
    out_spec = pl.BlockSpec((tb, out_dim), lambda i: (i, 0))

    # ---- cost estimate & VMEM budget (real, unpadded shapes) -----------------
    dims = [in_dim] + [w.shape[1] for w, _ in prepped_params]
    flops = 2 * B_p * sum(dims[l] * dims[l + 1] for l in range(num_layers))
    param_bytes = sum(w.size * w.dtype.itemsize + b.size * b.dtype.itemsize
                      for w, b in prepped_params)
    bytes_accessed = (xp.size * xp.dtype.itemsize    # input read
                      + B_p * out_dim * 4            # output write
                      + param_bytes)                 # weights/biases read once
    cost = pl.CostEstimate(flops=flops, transcendentals=0,
                           bytes_accessed=bytes_accessed)

    hid_max = max(dims[1:])
    resident_bytes = (
        param_bytes                 # weights/biases, single-buffered
        + 2 * tb * in_dim * 4       # double-buffered x tiles (f32)
        + 2 * tb * out_dim * 4      # double-buffered output tiles (f32)
        + 4 * tb * hid_max * 4      # activation temporaries / headroom
    )
    vmem_limit = int(min(max(4 * resident_bytes, 16 * 2**20), 64 * 2**20))

    out_padded = pl.pallas_call(
        _make_mlp_kernel(num_layers),
        out_shape=jax.ShapeDtypeStruct((B_p, out_dim), jnp.float32),
        grid_spec=pltpu.PrefetchScalarGridSpec(
            num_scalar_prefetch=0,
            grid=grid,
            in_specs=in_specs,
            out_specs=out_spec,
        ),
        compiler_params=pltpu.CompilerParams(
            dimension_semantics=("parallel",),
            vmem_limit_bytes=vmem_limit,
        ),
        cost_estimate=cost,
    )(xp, *flat_params)

    return out_padded if B_p == B else out_padded[:B]


def init_linear(key, fan_in, fan_out, dtype=jnp.float32):
    """PyTorch-style nn.Linear default init (uniform, bound = 1/sqrt(fan_in)).

    Returns weight as [fan_in, fan_out] (transposed vs. PyTorch) and bias [fan_out].
    """
    kw, kb = jax.random.split(key)
    bound = 1.0 / jnp.sqrt(jnp.asarray(fan_in, dtype))
    w = jax.random.uniform(kw, (fan_in, fan_out), dtype, minval=-bound, maxval=bound)
    b = jax.random.uniform(kb, (fan_out,), dtype, minval=-bound, maxval=bound)
    return w, b


def mlp_reference(x, params, *, matmul_dtype=jnp.float32):
    """Plain-JAX reference of MLPNetwork.forward (ReLU activation).

    With matmul_dtype=bf16 it mirrors the kernel arithmetic exactly
    (bf16 matmul operands, f32 accumulate / bias / ReLU).
    """
    n = len(params)
    h = x
    for layer, (w, b) in enumerate(params):
        h = jnp.dot(h.astype(matmul_dtype), w.astype(matmul_dtype),
                    preferred_element_type=jnp.float32) + b.reshape(1, -1).astype(jnp.float32)
        if layer < n - 1:
            h = jnp.maximum(h, 0.0)
    return h


if __name__ == "__main__":
    # Small shapes consistent with MLPNetwork(input_dim=16, hidden_dim=32,
    # num_hidden_layers=2, output_dim=1, activation='ReLU').
    input_dim = 16
    hidden_dim = 32
    output_dim = 1
    batch = 64   # with min_grid_steps=4 -> 16-row tiles, grid=(4,)

    key = jax.random.PRNGKey(0)
    kx, k0, k1, k2 = jax.random.split(key, 4)

    x = jax.random.normal(kx, (batch, input_dim), jnp.float32)
    params = (
        init_linear(k0, input_dim, hidden_dim),
        init_linear(k1, hidden_dim, hidden_dim),
        init_linear(k2, hidden_dim, output_dim),
    )

    # One-time parameter prep (hoisted out of the forward path).
    prepped = prepare_params(params)

    out = mlp_forward(x, prepped, batch_tile=1024, min_grid_steps=4)
    out = jax.block_until_ready(out)
    assert out.shape == (batch, output_dim), out.shape

    # Tight check against a reference with identical arithmetic (bf16 operands,
    # f32 accumulation).
    ref_bf16 = mlp_reference(x, params, matmul_dtype=jnp.bfloat16)
    assert jnp.allclose(out, ref_bf16, atol=1e-4, rtol=1e-4), (
        float(jnp.max(jnp.abs(out - ref_bf16)))
    )

    # Loose sanity check against the full-f32 PyTorch-equivalent math
    # (bf16 weights introduce only ~0.4% relative error per layer).
    ref_f32 = mlp_reference(x, params, matmul_dtype=jnp.float32)
    assert jnp.allclose(out, ref_f32, atol=5e-2, rtol=5e-2), (
        float(jnp.max(jnp.abs(out - ref_f32)))
    )

    print("KERNEL_OK")
</pallas_src>

<mosaic_0001>
module attributes {stable_mosaic.version = 11 : i64} {
  func.func @kernel(%arg0: i32, %arg1: memref<16x16xf32, #tpu.memory_space<vmem>>, %arg2: memref<16x32xbf16, #tpu.memory_space<vmem>>, %arg3: memref<1x32xf32, #tpu.memory_space<vmem>>, %arg4: memref<32x32xbf16, #tpu.memory_space<vmem>>, %arg5: memref<1x32xf32, #tpu.memory_space<vmem>>, %arg6: memref<32x1xbf16, #tpu.memory_space<vmem>>, %arg7: memref<1x1xf32, #tpu.memory_space<vmem>>, %arg8: memref<16x1xf32, #tpu.memory_space<vmem>>) attributes {dimension_semantics = [#tpu.dimension_semantics<parallel>], iteration_bounds = array<i64: 4>, scalar_prefetch = 0 : i64, scratch_operands = 0 : i64, tpu.core_type = #tpu.core_type<tc>, window_params = [{transform_indices = @transform_0, window_bounds = array<i64: 16, 16>}, {pipeline_mode = #tpu.pipeline_mode<synchronous>, transform_indices = @transform_1, window_bounds = array<i64: 16, 32>}, {pipeline_mode = #tpu.pipeline_mode<synchronous>, transform_indices = @transform_2, window_bounds = array<i64: 1, 32>}, {pipeline_mode = #tpu.pipeline_mode<synchronous>, transform_indices = @transform_3, window_bounds = array<i64: 32, 32>}, {pipeline_mode = #tpu.pipeline_mode<synchronous>, transform_indices = @transform_4, window_bounds = array<i64: 1, 32>}, {pipeline_mode = #tpu.pipeline_mode<synchronous>, transform_indices = @transform_5, window_bounds = array<i64: 32, 1>}, {pipeline_mode = #tpu.pipeline_mode<synchronous>, transform_indices = @transform_6, window_bounds = array<i64: 1, 1>}, {transform_indices = @transform_7, window_bounds = array<i64: 16, 1>}]} {
    %c0 = arith.constant 0 : index
    %c0_0 = arith.constant 0 : index
    %0 = vector.load %arg1[%c0, %c0_0] : memref<16x16xf32, #tpu.memory_space<vmem>>, vector<16x16xf32>
    %1 = arith.truncf %0 : vector<16x16xf32> to vector<16x16xbf16>
    %c0_1 = arith.constant 0 : index
    %c0_2 = arith.constant 0 : index
    %2 = vector.load %arg2[%c0_1, %c0_2] : memref<16x32xbf16, #tpu.memory_space<vmem>>, vector<16x32xbf16>
    %cst = arith.constant dense<0.000000e+00> : vector<16x32xf32>
    %3 = tpu.matmul %1, %2, %cst {dimension_numbers = #tpu.dot_dimension_numbers<[1], [0], [0], [1], [0, 0, 1, 1], [], []>} : vector<16x16xbf16>, vector<16x32xbf16>, vector<16x32xf32> -> vector<16x32xf32>
    %c0_3 = arith.constant 0 : index
    %c0_4 = arith.constant 0 : index
    %4 = vector.load %arg3[%c0_3, %c0_4] : memref<1x32xf32, #tpu.memory_space<vmem>>, vector<1x32xf32>
    %5 = vector.broadcast %4 : vector<1x32xf32> to vector<16x32xf32>
    %6 = arith.addf %3, %5 : vector<16x32xf32>
    %cst_5 = arith.constant 0.000000e+00 : f32
    %7 = vector.broadcast %cst_5 : f32 to vector<16x32xf32>
    %8 = arith.maximumf %6, %7 : vector<16x32xf32>
    %9 = arith.truncf %8 : vector<16x32xf32> to vector<16x32xbf16>
    %c0_6 = arith.constant 0 : index
    %c0_7 = arith.constant 0 : index
    %10 = vector.load %arg4[%c0_6, %c0_7] : memref<32x32xbf16, #tpu.memory_space<vmem>>, vector<32x32xbf16>
    %cst_8 = arith.constant dense<0.000000e+00> : vector<16x32xf32>
    %11 = tpu.matmul %9, %10, %cst_8 {dimension_numbers = #tpu.dot_dimension_numbers<[1], [0], [0], [1], [0, 0, 1, 1], [], []>} : vector<16x32xbf16>, vector<32x32xbf16>, vector<16x32xf32> -> vector<16x32xf32>
    %c0_9 = arith.constant 0 : index
    %c0_10 = arith.constant 0 : index
    %12 = vector.load %arg5[%c0_9, %c0_10] : memref<1x32xf32, #tpu.memory_space<vmem>>, vector<1x32xf32>
    %13 = vector.broadcast %12 : vector<1x32xf32> to vector<16x32xf32>
    %14 = arith.addf %11, %13 : vector<16x32xf32>
    %cst_11 = arith.constant 0.000000e+00 : f32
    %15 = vector.broadcast %cst_11 : f32 to vector<16x32xf32>
    %16 = arith.maximumf %14, %15 : vector<16x32xf32>
    %17 = arith.truncf %16 : vector<16x32xf32> to vector<16x32xbf16>
    %c0_12 = arith.constant 0 : index
    %c0_13 = arith.constant 0 : index
    %18 = vector.load %arg6[%c0_12, %c0_13] : memref<32x1xbf16, #tpu.memory_space<vmem>>, vector<32x1xbf16>
    %cst_14 = arith.constant dense<0.000000e+00> : vector<16x1xf32>
    %19 = tpu.matmul %17, %18, %cst_14 {dimension_numbers = #tpu.dot_dimension_numbers<[1], [0], [0], [1], [0, 0, 1, 1], [], []>} : vector<16x32xbf16>, vector<32x1xbf16>, vector<16x1xf32> -> vector<16x1xf32>
    %c0_15 = arith.constant 0 : index
    %c0_16 = arith.constant 0 : index
    %20 = vector.load %arg7[%c0_15, %c0_16] : memref<1x1xf32, #tpu.memory_space<vmem>>, vector<1x1xf32>
    %21 = vector.broadcast %20 : vector<1x1xf32> to vector<16x1xf32>
    %22 = arith.addf %19, %21 : vector<16x1xf32>
    %c0_17 = arith.constant 0 : index
    %c0_18 = arith.constant 0 : index
    %23 = vector.load %arg8[%c0_17, %c0_18] : memref<16x1xf32, #tpu.memory_space<vmem>>, vector<16x1xf32>
    tpu.vector_store %arg8[%c0_17, %c0_18], %22 {strides = array<i32>} : memref<16x1xf32, #tpu.memory_space<vmem>>, vector<16x1xf32>,
    return
  }
  func.func @transform_0(%arg0: i32) -> (i32, i32) {
    %c0_i32 = arith.constant 0 : i32
    %c0_i32_0 = arith.constant 0 : i32
    return %arg0, %c0_i32 : i32, i32
  }
  func.func @transform_1(%arg0: i32) -> (i32, i32) {
    %c0_i32 = arith.constant 0 : i32
    %c0_i32_0 = arith.constant 0 : i32
    %c0_i32_1 = arith.constant 0 : i32
    return %c0_i32, %c0_i32_0 : i32, i32
  }
  func.func @transform_2(%arg0: i32) -> (i32, i32) {
    %c0_i32 = arith.constant 0 : i32
    %c0_i32_0 = arith.constant 0 : i32
    %c0_i32_1 = arith.constant 0 : i32
    return %c0_i32, %c0_i32_0 : i32, i32
  }
  func.func @transform_3(%arg0: i32) -> (i32, i32) {
    %c0_i32 = arith.constant 0 : i32
    %c0_i32_0 = arith.constant 0 : i32
    %c0_i32_1 = arith.constant 0 : i32
    return %c0_i32, %c0_i32_0 : i32, i32
  }
  func.func @transform_4(%arg0: i32) -> (i32, i32) {
    %c0_i32 = arith.constant 0 : i32
    %c0_i32_0 = arith.constant 0 : i32
    %c0_i32_1 = arith.constant 0 : i32
    return %c0_i32, %c0_i32_0 : i32, i32
  }
  func.func @transform_5(%arg0: i32) -> (i32, i32) {
    %c0_i32 = arith.constant 0 : i32
    %c0_i32_0 = arith.constant 0 : i32
    %c0_i32_1 = arith.constant 0 : i32
    return %c0_i32, %c0_i32_0 : i32, i32
  }
  func.func @transform_6(%arg0: i32) -> (i32, i32) {
    %c0_i32 = arith.constant 0 : i32
    %c0_i32_0 = arith.constant 0 : i32
    %c0_i32_1 = arith.constant 0 : i32
    return %c0_i32, %c0_i32_0 : i32, i32
  }
  func.func @transform_7(%arg0: i32) -> (i32, i32) {
    %c0_i32 = arith.constant 0 : i32
    %c0_i32_0 = arith.constant 0 : i32
    return %arg0, %c0_i32 : i32, i32
  }
}

</mosaic_0001>

<llo_original>
// kernel: tpu_custom_call.1
$region0: #{tpu_custom_call.1}
  #allocation0 [shape = 'u32[]', space=smem, size = 0x4, offset = 0x4, fixed_abs, tag = 'smem constant byte address 0x4 - core index']
  #allocation1 [shape = 'u32[144,128]{1,0:T(1,128)}', space=vmem, size = 0x12000, scoped, tag = 'internal scratch']
  #allocation2 [shape = 'f32[1,1]{1,0:T(1,128)S(1)}', space=vmem, size = 0x200, scoped, tag = 'scoped memory for tpu_custom_call.1']
  %s0 = inlined_call_operand.vmem [shape: f32[64,16], index: 0, kind: input, shape index: {}]
  %s1 = inlined_call_operand.vmem [shape: bf16[16,32], index: 1, kind: input, shape index: {}]
  %s2 = inlined_call_operand.vmem [shape: f32[1,32], index: 2, kind: input, shape index: {}]
  %s3 = inlined_call_operand.vmem [shape: bf16[32,32], index: 3, kind: input, shape index: {}]
  %s4 = inlined_call_operand.vmem [shape: f32[1,32], index: 4, kind: input, shape index: {}]
  %s5 = inlined_call_operand.vmem [shape: bf16[32,1], index: 5, kind: input, shape index: {}]
  %s6 = inlined_call_operand.<no memory space> [shape: f32[1,1], index: 6, kind: input, shape index: {}]
  %s7 = inlined_call_operand.vmem [shape: f32[64,1], index: 7, kind: output, shape index: {}]
  %s8 = sld [smem:[#allocation0]]
  $region61: #{tpu_custom_call.1} parent=0
    _
  %s10 = ssub.s32 1, %s8
  %s11 = scalar_select 0, %s10, %s8
  %v12 = vstv %s6
  %13 = vst [vmem:[#allocation2] sm:$0x1] %v12
  loop: start=0, step=1, limit=6
  $region2: #{tpu_custom_call.1} parent=0 // loop_pre_header
    _
  $region3: #{tpu_custom_call.1} parent=0 // loop_header
    %s15 = sphi 0, %s19
    %p16 = scmp.ge.s32.totalorder %s15, 6
    %s25 = sphi 0, %s27
    %s28 = sphi 0, %s25
    %s29 = sphi 0, %s28
    %s45 = sphi 0, %s29
    %s49 = sphi 0, %s49
    %s51 = sphi 0, %s49
    %s52 = sphi 0, %s51
    %s66 = sphi 0, %s52
    %s70 = sphi 0, %s70
    %s72 = sphi 0, %s70
    %s73 = sphi 0, %s72
    %s87 = sphi 0, %s73
    %s91 = sphi 0, %s91
    %s93 = sphi 0, %s91
    %s94 = sphi 0, %s93
    %s108 = sphi 0, %s94
    %s112 = sphi 0, %s112
    %s114 = sphi 0, %s112
    %s115 = sphi 0, %s114
    %s129 = sphi 0, %s115
    %s133 = sphi 0, %s133
    %s135 = sphi 0, %s133
    %s136 = sphi 0, %s135
    %s150 = sphi 0, %s136
    %s154 = sphi 0, %s154
    %s156 = sphi 0, %s154
    %s157 = sphi 0, %s156
    %s171 = sphi 0, %s157
    %s177 = sphi 0, %s179
    %s180 = sphi 0, %s177
    %s181 = sphi 0, %s180
    %s197 = sphi 0, %s181
  $region4: #{tpu_custom_call.1} parent=0 // loop_header_branch
    %18 = sbr.rel (%p16) target = $region8
  $region5: #{tpu_custom_call.1} parent=0 // loop_body
    %s20 = ssub.s32 %s15, 1
    %s21 = ssub.s32 %s15, 2
    %s22 = sadd.s32 %s15, 1
    %s23 = ssub.s32 %s15, %s22
    %p24 = scmp.eq.s32.totalorder %s23, 0
    %s26 = sadd.s32 %s25, 1
    %s27 = scalar_select %p24, %s25, %s26
    %p30 = pneg %p24
    %p31 = scmp.eq.s32.totalorder %s15, 3
    %p32 = por %p30, %p31
    %p33 = scmp.ne.s32.totalorder %s25, %s28
    %p34 = scmp.eq.s32.totalorder %s15, 0
    %p35 = por %p33, %p34
    %p36 = scmp.ne.s32.totalorder %s25, %s28
    %p37 = scmp.eq.s32.totalorder %s20, 3
    %p38 = por %p36, %p37
    %p39 = scmp.ne.s32.totalorder %s28, %s29
    %p40 = scmp.eq.s32.totalorder %s20, 0
    %p41 = por %p39, %p40
    %p42 = scmp.ne.s32.totalorder %s28, %s29
    %p43 = scmp.eq.s32.totalorder %s21, 3
    %p44 = por %p42, %p43
    %p46 = scmp.ne.s32.totalorder %s29, %s45
    %p47 = scmp.eq.s32.totalorder %s21, 0
    %p48 = por %p46, %p47
    %s50 = sadd.s32 %s49, 1
    %p53 = scmp.eq.s32.totalorder %s15, 3
    %p54 = scmp.ne.s32.totalorder %s49, %s51
    %p55 = scmp.eq.s32.totalorder %s15, 0
    %p56 = por %p54, %p55
    %p57 = scmp.ne.s32.totalorder %s49, %s51
    %p58 = scmp.eq.s32.totalorder %s20, 3
    %p59 = por %p57, %p58
    %p60 = scmp.ne.s32.totalorder %s51, %s52
    %p61 = scmp.eq.s32.totalorder %s20, 0
    %p62 = por %p60, %p61
    %p63 = scmp.ne.s32.totalorder %s51, %s52
    %p64 = scmp.eq.s32.totalorder %s21, 3
    %p65 = por %p63, %p64
    %p67 = scmp.ne.s32.totalorder %s52, %s66
    %p68 = scmp.eq.s32.totalorder %s21, 0
    %p69 = por %p67, %p68
    %s71 = sadd.s32 %s70, 1
    %p74 = scmp.eq.s32.totalorder %s15, 3
    %p75 = scmp.ne.s32.totalorder %s70, %s72
    %p76 = scmp.eq.s32.totalorder %s15, 0
    %p77 = por %p75, %p76
    %p78 = scmp.ne.s32.totalorder %s70, %s72
    %p79 = scmp.eq.s32.totalorder %s20, 3
    %p80 = por %p78, %p79
    %p81 = scmp.ne.s32.totalorder %s72, %s73
    %p82 = scmp.eq.s32.totalorder %s20, 0
    %p83 = por %p81, %p82
    %p84 = scmp.ne.s32.totalorder %s72, %s73
    %p85 = scmp.eq.s32.totalorder %s21, 3
    %p86 = por %p84, %p85
    %p88 = scmp.ne.s32.totalorder %s73, %s87
    %p89 = scmp.eq.s32.totalorder %s21, 0
    %p90 = por %p88, %p89
    %s92 = sadd.s32 %s91, 1
    %p95 = scmp.eq.s32.totalorder %s15, 3
    %p96 = scmp.ne.s32.totalorder %s91, %s93
    %p97 = scmp.eq.s32.totalorder %s15, 0
    %p98 = por %p96, %p97
    %p99 = scmp.ne.s32.totalorder %s91, %s93
    %p100 = scmp.eq.s32.totalorder %s20, 3
    %p101 = por %p99, %p100
    %p102 = scmp.ne.s32.totalorder %s93, %s94
    %p103 = scmp.eq.s32.totalorder %s20, 0
    %p104 = por %p102, %p103
    %p105 = scmp.ne.s32.totalorder %s93, %s94
    %p106 = scmp.eq.s32.totalorder %s21, 3
    %p107 = por %p105, %p106
    %p109 = scmp.ne.s32.totalorder %s94, %s108
    %p110 = scmp.eq.s32.totalorder %s21, 0
    %p111 = por %p109, %p110
    %s113 = sadd.s32 %s112, 1
    %p116 = scmp.eq.s32.totalorder %s15, 3
    %p117 = scmp.ne.s32.totalorder %s112, %s114
    %p118 = scmp.eq.s32.totalorder %s15, 0
    %p119 = por %p117, %p118
    %p120 = scmp.ne.s32.totalorder %s112, %s114
    %p121 = scmp.eq.s32.totalorder %s20, 3
    %p122 = por %p120, %p121
    %p123 = scmp.ne.s32.totalorder %s114, %s115
    %p124 = scmp.eq.s32.totalorder %s20, 0
    %p125 = por %p123, %p124
    %p126 = scmp.ne.s32.totalorder %s114, %s115
    %p127 = scmp.eq.s32.totalorder %s21, 3
    %p128 = por %p126, %p127
    %p130 = scmp.ne.s32.totalorder %s115, %s129
    %p131 = scmp.eq.s32.totalorder %s21, 0
    %p132 = por %p130, %p131
    %s134 = sadd.s32 %s133, 1
    %p137 = scmp.eq.s32.totalorder %s15, 3
    %p138 = scmp.ne.s32.totalorder %s133, %s135
    %p139 = scmp.eq.s32.totalorder %s15, 0
    %p140 = por %p138, %p139
    %p141 = scmp.ne.s32.totalorder %s133, %s135
    %p142 = scmp.eq.s32.totalorder %s20, 3
    %p143 = por %p141, %p142
    %p144 = scmp.ne.s32.totalorder %s135, %s136
    %p145 = scmp.eq.s32.totalorder %s20, 0
    %p146 = por %p144, %p145
    %p147 = scmp.ne.s32.totalorder %s135, %s136
    %p148 = scmp.eq.s32.totalorder %s21, 3
    %p149 = por %p147, %p148
    %p151 = scmp.ne.s32.totalorder %s136, %s150
    %p152 = scmp.eq.s32.totalorder %s21, 0
    %p153 = por %p151, %p152
    %s155 = sadd.s32 %s154, 1
    %p158 = scmp.eq.s32.totalorder %s15, 3
    %p159 = scmp.ne.s32.totalorder %s154, %s156
    %p160 = scmp.eq.s32.totalorder %s15, 0
    %p161 = por %p159, %p160
    %p162 = scmp.ne.s32.totalorder %s154, %s156
    %p163 = scmp.eq.s32.totalorder %s20, 3
    %p164 = por %p162, %p163
    %p165 = scmp.ne.s32.totalorder %s156, %s157
    %p166 = scmp.eq.s32.totalorder %s20, 0
    %p167 = por %p165, %p166
    %p168 = scmp.ne.s32.totalorder %s156, %s157
    %p169 = scmp.eq.s32.totalorder %s21, 3
    %p170 = por %p168, %p169
    %p172 = scmp.ne.s32.totalorder %s157, %s171
    %p173 = scmp.eq.s32.totalorder %s21, 0
    %p174 = por %p172, %p173
    %s175 = ssub.s32 %s15, %s22
    %p176 = scmp.eq.s32.totalorder %s175, 0
    %s178 = sadd.s32 %s177, 1
    %s179 = scalar_select %p176, %s177, %s178
    %p182 = pneg %p176
    %p183 = scmp.eq.s32.totalorder %s15, 3
    %p184 = por %p182, %p183
    %p185 = scmp.ne.s32.totalorder %s177, %s180
    %p186 = scmp.eq.s32.totalorder %s15, 0
    %p187 = por %p185, %p186
    %p188 = scmp.ne.s32.totalorder %s177, %s180
    %p189 = scmp.eq.s32.totalorder %s20, 3
    %p190 = por %p188, %p189
    %p191 = scmp.ne.s32.totalorder %s180, %s181
    %p192 = scmp.eq.s32.totalorder %s20, 0
    %p193 = por %p191, %p192
    %p194 = scmp.ne.s32.totalorder %s180, %s181
    %p195 = scmp.eq.s32.totalorder %s21, 3
    %p196 = por %p194, %p195
    %p198 = scmp.ne.s32.totalorder %s181, %s197
    %p199 = scmp.eq.s32.totalorder %s21, 0
    %p200 = por %p198, %p199
    %p201 = scmp.le.s32.totalorder 1, %s15
    %p202 = scmp.lt.s32.totalorder %s15, 5
    %p203 = pnand %p201, %p202
    %p204 = pneg %p203
    // Predicated region
    $region9: #{tpu_custom_call.1} parent=5 // pred_check
      _
    $region10: #{tpu_custom_call.1} parent=5 // pred_check_branch
      %206 = sbr.rel (%p203) target = $region12
    $region11: #{tpu_custom_call.1} parent=5 // pred_region
      %s207 = ssub.s32 %s15, 1
      // Predicated region
      $region13: #{tpu_custom_call.1} parent=11 // pred_check
        %p208 = pneg %p62
      $region14: #{tpu_custom_call.1} parent=11 // pred_check_branch
        %210 = sbr.rel (%p208) target = $region16
      $region15: #{tpu_custom_call.1} parent=11 // pred_region
        _
      $region16: #{tpu_custom_call.1} parent=11 // pred_fallthru
        _
      // Predicated region
      $region17: #{tpu_custom_call.1} parent=11 // pred_check
        %p211 = pneg %p83
      $region18: #{tpu_custom_call.1} parent=11 // pred_check_branch
        %213 = sbr.rel (%p211) target = $region20
      $region19: #{tpu_custom_call.1} parent=11 // pred_region
        _
      $region20: #{tpu_custom_call.1} parent=11 // pred_fallthru
        _
      // Predicated region
      $region21: #{tpu_custom_call.1} parent=11 // pred_check
        %p214 = pneg %p104
      $region22: #{tpu_custom_call.1} parent=11 // pred_check_branch
        %216 = sbr.rel (%p214) target = $region24
      $region23: #{tpu_custom_call.1} parent=11 // pred_region
        _
      $region24: #{tpu_custom_call.1} parent=11 // pred_fallthru
        _
      // Predicated region
      $region25: #{tpu_custom_call.1} parent=11 // pred_check
        %p217 = pneg %p125
      $region26: #{tpu_custom_call.1} parent=11 // pred_check_branch
        %219 = sbr.rel (%p217) target = $region28
      $region27: #{tpu_custom_call.1} parent=11 // pred_region
        _
      $region28: #{tpu_custom_call.1} parent=11 // pred_fallthru
        _
      // Predicated region
      $region29: #{tpu_custom_call.1} parent=11 // pred_check
        %p220 = pneg %p146
      $region30: #{tpu_custom_call.1} parent=11 // pred_check_branch
        %222 = sbr.rel (%p220) target = $region32
      $region31: #{tpu_custom_call.1} parent=11 // pred_region
        _
      $region32: #{tpu_custom_call.1} parent=11 // pred_fallthru
        _
      // Predicated region
      $region33: #{tpu_custom_call.1} parent=11 // pred_check
        %p223 = pneg %p167
      $region34: #{tpu_custom_call.1} parent=11 // pred_check_branch
        %225 = sbr.rel (%p223) target = $region36
      $region35: #{tpu_custom_call.1} parent=11 // pred_region
        _
      $region36: #{tpu_custom_call.1} parent=11 // pred_fallthru
        _
    $region12: #{tpu_custom_call.1} parent=5 // pred_fallthru
      _
    %p226 = scmp.lt.s32.totalorder %s15, 4
    // Predicated region
    $region37: #{tpu_custom_call.1} parent=5 // pred_check
      %p227 = pneg %p226
    $region38: #{tpu_custom_call.1} parent=5 // pred_check_branch
      %229 = sbr.rel (%p227) target = $region40
    $region39: #{tpu_custom_call.1} parent=5 // pred_region
      // Predicated region
      $region41: #{tpu_custom_call.1} parent=39 // pred_check
        %p230 = pneg %p35
      $region42: #{tpu_custom_call.1} parent=39 // pred_check_branch
        %232 = sbr.rel (%p230) target = $region44
      $region43: #{tpu_custom_call.1} parent=39 // pred_region
        %s233 = smul.u32 2, %s15
        %p234 = scmp.lt.s32.totalorder %s233, 7
        %s235 = scalar_select %p234, %s233, 7
        %s236 = smul.addr %s235, 8
        %s237 = scalar_lea.vmem %s0, %s236
        %s238 = smul.u32 2, %s15
      $region44: #{tpu_custom_call.1} parent=39 // pred_fallthru
        _
    $region40: #{tpu_custom_call.1} parent=5 // pred_fallthru
      _
    %p239 = scmp.le.s32.totalorder 1, %s15
    %p240 = scmp.lt.s32.totalorder %s15, 5
    %p241 = pnand %p239, %p240
    %p242 = pneg %p241
    // Predicated region
    $region45: #{tpu_custom_call.1} parent=5 // pred_check
      _
    $region46: #{tpu_custom_call.1} parent=5 // pred_check_branch
      %244 = sbr.rel (%p241) target = $region48
    $region47: #{tpu_custom_call.1} parent=5 // pred_region
      %s245 = ssub.s32 %s15, 1
      %s246 = smul.u32 2, %s20
      %p247 = scmp.lt.s32.totalorder %s246, 7
      %s248 = scalar_select %p247, %s246, 7
      %s249 = smul.addr %s248, 8
      %s250 = scalar_lea.vmem %s0, %s249
      %p251 = pneg %p41
      %p252 = pneg %p38
      %p253 = pneg %p62
      %p254 = pneg %p59
      %p255 = pneg %p83
      %p256 = pneg %p80
      %p257 = pneg %p104
      %p258 = pneg %p101
      %p259 = pneg %p125
      %p260 = pneg %p122
      %p261 = pneg %p146
      %p262 = pneg %p143
      %p263 = pneg %p167
      %p264 = pneg %p164
      %p265 = pneg %p193
      %p266 = pneg %p190
      %s267 = smul.u32 2, %s20
      %p268 = scmp.lt.s32.totalorder %s267, 7
      %s269 = scalar_select %p268, %s267, 7
      %s270 = smul.addr %s269, 8
      %s271 = scalar_lea.vmem %s7, %s270
      %s272 = smul.u32 2, %s20
      %p273 = scmp.lt.s32.totalorder %s272, 7
      %s274 = scalar_select %p273, %s272, 7
      %s275 = smul.addr %s274, 8
      %s276 = scalar_lea.vmem %s0, %s275
      %s277 = smul.u32 2, %s20
      %s278 = smul.u32 2, %s20
      %p279 = scmp.lt.s32.totalorder %s278, 7
      %s280 = scalar_select %p279, %s278, 7
      %s281 = smul.addr %s280, 8
      %s282 = scalar_lea.vmem %s7, %s281
      %s283 = smul.u32 2, %s20
      %v285 = vld [vmem:[%s276] sm:$0xff]
      %v286 = vld [vmem:[%s276 + $0x8] sm:$0xff]
      %v287 = vpack.c.bf16 %v286, %v285
      %v288 = vld [vmem:[%s1] sm:$0xf]
      %v289 = vld [vmem:[%s1 + $0x4] sm:$0xf]
      %v290 = vld [vmem:[%s2] sm:$0x1]
      %v292 = vlaneseq
      %v293 = vshrl.u32 %v292, 7
      %v294 = vsub.s32 0, %v293
      %v295 = vrot.slane %v290, %v294
      %v299 = vunpack.c.l.b16 %v288
      %v300 = vunpack.c.l.b16 %v289
      %v301 = vpack.c.b16 %v300, %v299
      %vm303 = vcmask 130048
      %v305 = vsel %vm303, %v287, 0
      %307 = vmatprep.subr.bf16.mxu0 0
      %308 = vmatpush1.bf16.msra.mxu0 %v301
      %309 = vmatprep.subr.bf16.mxu0 0
      %310 = vmatpush1.bf16.msra.mxu0 0
      %311 = vmatprep.subr.bf16.mxu0 0
      %312 = vmatpush1.bf16.msra.mxu0 0
      %313 = vmatprep.subr.bf16.mxu0 0
      %314 = vmatpush1.bf16.msra.mxu0 0
      %315 = vmatprep.subr.bf16.mxu0 0
      %316 = vmatpush1.bf16.msra.mxu0 0
      %317 = vmatprep.subr.bf16.mxu0 0
      %318 = vmatpush1.bf16.msra.mxu0 0
      %319 = vmatprep.subr.bf16.mxu0 0
      %320 = vmatpush1.bf16.msra.mxu0 0
      %321 = vmatprep.subr.bf16.mxu0 0
      %322 = vmatpush1.bf16.msra.mxu0 0
      %323 = vmatprep.subr.bf16.mxu0 0
      %324 = vmatpush1.bf16.msra.mxu0 0
      %325 = vmatprep.subr.bf16.mxu0 0
      %326 = vmatpush1.bf16.msra.mxu0 0
      %327 = vmatprep.subr.bf16.mxu0 0
      %328 = vmatpush1.bf16.msra.mxu0 0
      %329 = vmatprep.subr.bf16.mxu0 0
      %330 = vmatpush1.bf16.msra.mxu0 0
      %331 = vmatprep.subr.bf16.mxu0 0
      %332 = vmatpush1.bf16.msra.mxu0 0
      %333 = vmatprep.subr.bf16.mxu0 0
      %334 = vmatpush1.bf16.msra.mxu0 0
      %335 = vmatprep.subr.bf16.mxu0 0
      %336 = vmatpush1.bf16.msra.mxu0 0
      %337 = vmatprep.subr.bf16.mxu0 0
      %338 = vmatpush1.bf16.msra.mxu0 0
      %339 = vmatprep.mubr.bf16.mxu0 0
      %340 = vmatmul.mubr.bf16.gmra.mrb[0].mxu0 %v305
      %v341 = vpop.f32.mrb[0].mxu0
      %v342 = vadd.f32 %v295, %v341
      %v343 = vpop.f32.mrb[0].mxu0
      %v344 = vpop.f32.mrb[0].mxu0
      %v345 = vadd.f32 %v295, %v344
      %v346 = vpop.f32.mrb[0].mxu0
      %347 = vdwg.mxu0
      %v348 = vmax.f32 %v342, 0.0
      %v349 = vmax.f32 %v345, 0.0
      %v350 = vpack.c.bf16 %v349, %v348
      %v351 = vld [vmem:[%s3] sm:$0xf]
      %v352 = vld [vmem:[%s3 + $0x4] sm:$0xf]
      %v353 = vld [vmem:[%s3 + $0x8] sm:$0xf]
      %v354 = vld [vmem:[%s3 + $0xc] sm:$0xf]
      %v355 = vld [vmem:[%s4] sm:$0x1]
      %v357 = vlaneseq
      %v358 = vshrl.u32 %v357, 7
      %v359 = vsub.s32 0, %v358
      %v360 = vrot.slane %v355, %v359
      %v366 = vunpack.c.l.b16 %v351
      %v367 = vunpack.c.l.b16 %v352
      %v368 = vunpack.c.l.b16 %v353
      %v369 = vunpack.c.l.b16 %v354
      %v370 = vpack.c.b16 %v367, %v366
      %v371 = vpack.c.b16 %v369, %v368
      %vm374 = vcmask 261120
      %v376 = vsel %vm374, %v350, 0
      %378 = vmatprep.subr.bf16.mxu0 0
      %379 = vmatpush1.bf16.msra.mxu0 %v370
      %380 = vmatprep.subr.bf16.mxu0 0
      %381 = vmatpush1.bf16.msra.mxu0 %v371
      %382 = vmatprep.subr.bf16.mxu0 0
      %383 = vmatpush1.bf16.msra.mxu0 0
      %384 = vmatprep.subr.bf16.mxu0 0
      %385 = vmatpush1.bf16.msra.mxu0 0
      %386 = vmatprep.subr.bf16.mxu0 0
      %387 = vmatpush1.bf16.msra.mxu0 0
      %388 = vmatprep.subr.bf16.mxu0 0
      %389 = vmatpush1.bf16.msra.mxu0 0
      %390 = vmatprep.subr.bf16.mxu0 0
      %391 = vmatpush1.bf16.msra.mxu0 0
      %392 = vmatprep.subr.bf16.mxu0 0
      %393 = vmatpush1.bf16.msra.mxu0 0
      %394 = vmatprep.subr.bf16.mxu0 0
      %395 = vmatpush1.bf16.msra.mxu0 0
      %396 = vmatprep.subr.bf16.mxu0 0
      %397 = vmatpush1.bf16.msra.mxu0 0
      %398 = vmatprep.subr.bf16.mxu0 0
      %399 = vmatpush1.bf16.msra.mxu0 0
      %400 = vmatprep.subr.bf16.mxu0 0
      %401 = vmatpush1.bf16.msra.mxu0 0
      %402 = vmatprep.subr.bf16.mxu0 0
      %403 = vmatpush1.bf16.msra.mxu0 0
      %404 = vmatprep.subr.bf16.mxu0 0
      %405 = vmatpush1.bf16.msra.mxu0 0
      %406 = vmatprep.subr.bf16.mxu0 0
      %407 = vmatpush1.bf16.msra.mxu0 0
      %408 = vmatprep.subr.bf16.mxu0 0
      %409 = vmatpush1.bf16.msra.mxu0 0
      %410 = vmatprep.mubr.bf16.mxu0 0
      %411 = vmatmul.mubr.bf16.gmra.mrb[0].mxu0 %v376
      %v412 = vpop.f32.mrb[0].mxu0
      %v413 = vadd.f32 %v360, %v412
      %v414 = vpop.f32.mrb[0].mxu0
      %v415 = vpop.f32.mrb[0].mxu0
      %v416 = vadd.f32 %v360, %v415
      %v417 = vpop.f32.mrb[0].mxu0
      %418 = vdwg.mxu0
      %v419 = vmax.f32 %v413, 0.0
      %v420 = vmax.f32 %v416, 0.0
      %v421 = vpack.c.bf16 %v420, %v419
      %v422 = vld [vmem:[%s5] sm:$0xf]
      %v423 = vld [vmem:[%s5 + $0x4] sm:$0xf]
      %v424 = vld [vmem:[%s5 + $0x8] sm:$0xf]
      %v425 = vld [vmem:[%s5 + $0xc] sm:$0xf]
      %v426 = vld [vmem:[#allocation2] sm:$0x1]
      %v428 = vlaneseq
      %v429 = vshrl.u32 %v428, 7
      %v430 = vsub.s32 0, %v429
      %v431 = vrot.slane %v426, %v430
      %v437 = vunpack.c.l.b16 %v422
      %v438 = vunpack.c.l.b16 %v423
      %v439 = vunpack.c.l.b16 %v424
      %v440 = vunpack.c.l.b16 %v425
      %v441 = vpack.c.b16 %v438, %v437
      %v442 = vpack.c.b16 %v440, %v439
      %v446 = vsel %vm374, %v421, 0
      %448 = vmatprep.subr.bf16.mxu0 0
      %449 = vmatpush1.bf16.msra.mxu0 %v441
      %450 = vmatprep.subr.bf16.mxu0 0
      %451 = vmatpush1.bf16.msra.mxu0 %v442
      %452 = vmatprep.subr.bf16.mxu0 0
      %453 = vmatpush1.bf16.msra.mxu0 0
      %454 = vmatprep.subr.bf16.mxu0 0
      %455 = vmatpush1.bf16.msra.mxu0 0
      %456 = vmatprep.subr.bf16.mxu0 0
      %457 = vmatpush1.bf16.msra.mxu0 0
      %458 = vmatprep.subr.bf16.mxu0 0
      %459 = vmatpush1.bf16.msra.mxu0 0
      %460 = vmatprep.subr.bf16.mxu0 0
      %461 = vmatpush1.bf16.msra.mxu0 0
      %462 = vmatprep.subr.bf16.mxu0 0
      %463 = vmatpush1.bf16.msra.mxu0 0
      %464 = vmatprep.subr.bf16.mxu0 0
      %465 = vmatpush1.bf16.msra.mxu0 0
      %466 = vmatprep.subr.bf16.mxu0 0
      %467 = vmatpush1.bf16.msra.mxu0 0
      %468 = vmatprep.subr.bf16.mxu0 0
      %469 = vmatpush1.bf16.msra.mxu0 0
      %470 = vmatprep.subr.bf16.mxu0 0
      %471 = vmatpush1.bf16.msra.mxu0 0
      %472 = vmatprep.subr.bf16.mxu0 0
      %473 = vmatpush1.bf16.msra.mxu0 0
      %474 = vmatprep.subr.bf16.mxu0 0
      %475 = vmatpush1.bf16.msra.mxu0 0
      %476 = vmatprep.subr.bf16.mxu0 0
      %477 = vmatpush1.bf16.msra.mxu0 0
      %478 = vmatprep.subr.bf16.mxu0 0
      %479 = vmatpush1.bf16.msra.mxu0 0
      %480 = vmatprep.mubr.bf16.mxu0 0
      %481 = vmatmul.mubr.bf16.gmra.mrb[0].mxu0 %v446
      %v482 = vpop.f32.mrb[0].mxu0
      %v483 = vadd.f32 %v431, %v482
      %v484 = vpop.f32.mrb[0].mxu0
      %v485 = vpop.f32.mrb[0].mxu0
      %v486 = vadd.f32 %v431, %v485
      %v487 = vpop.f32.mrb[0].mxu0
      %488 = vdwg.mxu0
      %vm489 = vcmask 7168
      %490 = vst.msk [vmem:[%s282] sm:$0xff] %vm489, %v483
      %491 = vst.msk [vmem:[%s282 + $0x8] sm:$0xff] %vm489, %v486
      %s492 = smul.u32 2, %s20
      %p493 = scmp.lt.s32.totalorder %s492, 7
      %s494 = scalar_select %p493, %s492, 7
      %s495 = smul.addr %s494, 8
      %s496 = scalar_lea.vmem %s7, %s495
      // Predicated region
      $region49: #{tpu_custom_call.1} parent=47 // pred_check
        %p497 = pneg %p190
      $region50: #{tpu_custom_call.1} parent=47 // pred_check_branch
        %499 = sbr.rel (%p497) target = $region52
      $region51: #{tpu_custom_call.1} parent=47 // pred_region
        %s500 = smul.u32 2, %s20
      $region52: #{tpu_custom_call.1} parent=47 // pred_fallthru
        _
    $region48: #{tpu_custom_call.1} parent=5 // pred_fallthru
      _
    %p501 = scmp.le.s32.totalorder 2, %s15
    // Predicated region
    $region53: #{tpu_custom_call.1} parent=5 // pred_check
      %p502 = pneg %p501
    $region54: #{tpu_custom_call.1} parent=5 // pred_check_branch
      %504 = sbr.rel (%p502) target = $region56
    $region55: #{tpu_custom_call.1} parent=5 // pred_region
      %s505 = ssub.s32 %s15, 2
      // Predicated region
      $region57: #{tpu_custom_call.1} parent=55 // pred_check
        %p506 = pneg %p196
      $region58: #{tpu_custom_call.1} parent=55 // pred_check_branch
        %508 = sbr.rel (%p506) target = $region60
      $region59: #{tpu_custom_call.1} parent=55 // pred_region
        %s509 = smul.u32 2, %s21
        %p510 = scmp.lt.s32.totalorder %s509, 7
        %s511 = scalar_select %p510, %s509, 7
        %s512 = smul.addr %s511, 8
        %s513 = scalar_lea.vmem %s7, %s512
      $region60: #{tpu_custom_call.1} parent=55 // pred_fallthru
        _
    $region56: #{tpu_custom_call.1} parent=5 // pred_fallthru
      _
  $region6: #{tpu_custom_call.1} parent=0 // loop_footer
    %s19 = sadd.s32 1, %s15
  $region7: #{tpu_custom_call.1} parent=0 // loop_footer_branch
    %14 = sbr.rel target = $region3
  $region8: #{tpu_custom_call.1} parent=0 // loop_exit
    _

</llo_original>
